<compile_context>
chip_gen: v7x
topology: tpu7x:2x2x1
jax: 0.10.0
libtpu: 0.0.40
codegen_flags: <defaults>
</compile_context>

<pallas_src>
import jax
import jax.numpy as jnp
from jax import lax
from jax.experimental import pallas as pl
from jax.experimental.pallas import tpu as pltpu

N_EMBEDS = 384          # C, fixed by the module
BLOCK_SIZE = 256        # tril buffer size in the PyTorch module; only tril[:T, :T] is used


# --------------------------------------------------------------------------------------
# Kernel
# --------------------------------------------------------------------------------------
def _head_kernel(x_ref, w_ref, o_ref):
    # x_ref: (Bb*T, C) bf16   w_ref: (C, 3*SEG) bf16   o_ref: (Bb, T, H) f32
    Bb, T, H = o_ref.shape
    C = x_ref.shape[1]
    SEG = w_ref.shape[1] // 3          # 128-lane segment per projection

    scale = C ** (-0.5)                # NOTE: PyTorch code scales by C (= n_embeds), not head_size

    # ---- fused QKV projection: one MXU pass over x, bf16 operands, f32 accumulate ----
    qkv = jnp.dot(x_ref[...], w_ref[...],
                  preferred_element_type=jnp.float32)          # (Bb*T, 3*SEG) f32
    qkv = qkv.reshape(Bb, T, 3 * SEG)                          # f32 leading-dim split

    # whole-vreg (128-lane) slices; padded columns beyond H are exactly zero
    k = qkv[:, :, 0:SEG].astype(jnp.bfloat16)                  # (Bb, T, SEG)
    q = (qkv[:, :, SEG:2 * SEG] * scale).astype(jnp.bfloat16)  # scale folded into q
    v = qkv[:, :, 2 * SEG:].astype(jnp.bfloat16)               # (Bb, T, SEG)

    # ---- attention scores: contract last dims directly (no explicit k transpose) ----
    wei = jnp.einsum('bqd,bkd->bqk', q, k,
                     preferred_element_type=jnp.float32)       # (Bb, T, T) f32

    # causal mask from a single 2-D iota pair, broadcast over batch
    row = lax.broadcasted_iota(jnp.int32, (T, T), 0)
    col = lax.broadcasted_iota(jnp.int32, (T, T), 1)
    wei = jnp.where((col <= row)[None, :, :], wei, -jnp.inf)

    # ---- numerically stable softmax in f32 (portable to v5e: no bf16 VPU/EUP) ----
    m = jnp.max(wei, axis=-1, keepdims=True)
    e = jnp.exp(wei - m)
    s = jnp.sum(e, axis=-1, keepdims=True)
    p = (e * pl.reciprocal(s, approx=False)).astype(jnp.bfloat16)   # exact recip: (Bb,T,1) only

    # dropout == identity in eval mode

    out = jnp.einsum('bqk,bkd->bqd', p, v,
                     preferred_element_type=jnp.float32)       # (Bb, T, SEG), cols >= H are 0
    o_ref[...] = out[:, :, :H].astype(o_ref.dtype)


# --------------------------------------------------------------------------------------
# Wrapper / tiling heuristics
# --------------------------------------------------------------------------------------
def _chip_config():
    """Per-generation grid/VMEM policy (safe fallback if detection fails)."""
    try:
        kind = jax.devices()[0].device_kind.lower()
    except Exception:
        kind = ""
    if "v7" in kind:
        # 2 TensorCores/chip, only 64 MiB VMEM per core: headroom + feed both cores.
        return {"min_grid_steps": 4, "vmem_limit": 48 * 1024 * 1024}
    if "v5" in kind or "v6" in kind:
        # 1 TensorCore, 128 MiB VMEM: no point keeping extra grid steps.
        return {"min_grid_steps": 1, "vmem_limit": 64 * 1024 * 1024}
    return {"min_grid_steps": 2, "vmem_limit": 32 * 1024 * 1024}


def _per_batch_vmem_bytes(T, C, seg):
    """Rough VMEM footprint per fused batch element (for block-size capping)."""
    x_b = 2 * T * C * 2                      # bf16 x tile, double-buffered
    out_b = 2 * T * seg * 4                  # f32 out tile, double-buffered (upper bound)
    qkv_b = T * 3 * seg * 4                  # f32 qkv
    kqv_b = 3 * T * seg * 2                  # bf16 k, q, v
    att_b = 2 * T * T * 4 + T * T * 2        # f32 wei/e + bf16 p
    return x_b + out_b + qkv_b + kqv_b + att_b


def _choose_block_batch(B, T, *, min_grid_steps, per_batch_bytes, vmem_budget):
    """How many batch elements to fuse per (sequential) grid step."""
    target_rows = 2048                                   # amortize ~0.35us/step pipeline overhead
    cap_rows = max(1, target_rows // max(T, 1))
    cap_vmem = max(1, int((vmem_budget * 0.6) // max(per_batch_bytes, 1)))
    cap = min(B, cap_rows, cap_vmem)

    def valid(d):
        # flattened x block (d*T, C): sublane dim must be 8-aligned or the full extent
        return (d * T) % 8 == 0 or d == B

    divisors = [d for d in range(1, B + 1) if B % d == 0 and valid(d)]   # d=B always valid
    good = [d for d in divisors if d <= cap and B // d >= min_grid_steps]
    if good:
        return max(good)
    good = [d for d in divisors if d <= cap]
    if good:
        return max(good)
    return min(divisors)


def prepare_head_weights(w_key, w_query, w_value):
    """Build the fused, 128-lane-padded, bf16 QKV weight once (hoisted out of forward)."""
    C, H = w_key.shape
    assert w_query.shape == (C, H) and w_value.shape == (C, H)
    seg = max(128, ((H + 127) // 128) * 128)

    def pad(w):
        return w if H == seg else jnp.pad(w, ((0, 0), (0, seg - H)))

    w_qkv = jnp.concatenate([pad(w_key), pad(w_query), pad(w_value)], axis=1)  # (C, 3*seg)
    return w_qkv.astype(jnp.bfloat16), H


def head_forward(x, w_qkv, head_size, *, block_batch=None):
    """x: (B, T, C) float32; w_qkv: (C, 3*seg) bf16 from prepare_head_weights -> (B, T, H) f32."""
    B, T, C = x.shape
    seg = w_qkv.shape[1] // 3
    assert w_qkv.shape[0] == C and head_size <= seg
    assert T <= BLOCK_SIZE

    cfg = _chip_config()
    if block_batch is None:
        block_batch = _choose_block_batch(
            B, T,
            min_grid_steps=cfg["min_grid_steps"],
            per_batch_bytes=_per_batch_vmem_bytes(T, C, seg),
            vmem_budget=cfg["vmem_limit"])
    assert B % block_batch == 0
    Bb = block_batch

    # Flatten + bf16-cast in the wrapper: halves the dominant input DMA stream and
    # avoids any packed-dtype reshape inside the kernel.
    x_flat = x.reshape(B * T, C).astype(jnp.bfloat16)

    out = pl.pallas_call(
        _head_kernel,
        out_shape=jax.ShapeDtypeStruct((B, T, head_size), x.dtype),
        grid_spec=pltpu.PrefetchScalarGridSpec(
            num_scalar_prefetch=0,
            grid=(B // Bb,),
            in_specs=[
                pl.BlockSpec((Bb * T, C), lambda b: (b, 0)),
                pl.BlockSpec((C, 3 * seg), lambda b: (0, 0)),
            ],
            out_specs=pl.BlockSpec((Bb, T, head_size), lambda b: (b, 0, 0)),
        ),
        compiler_params=pltpu.CompilerParams(
            dimension_semantics=("parallel",),
            vmem_limit_bytes=cfg["vmem_limit"],
        ),
    )(x_flat, w_qkv)
    return out


def head_reference(x, w_key, w_query, w_value):
    """Pure-JAX f32 reference mirroring the PyTorch forward (eval mode)."""
    B, T, C = x.shape
    k = x @ w_key
    q = x @ w_query
    v = x @ w_value
    wei = (q @ jnp.swapaxes(k, -2, -1)) * (C ** -0.5)
    mask = jnp.tril(jnp.ones((T, T), dtype=bool))
    wei = jnp.where(mask, wei, -jnp.inf)
    wei = jax.nn.softmax(wei, axis=-1)
    return wei @ v


if __name__ == "__main__":
    B, T, C = 2, 8, N_EMBEDS
    head_size = 64

    key = jax.random.PRNGKey(0)
    kx, kk, kq, kv = jax.random.split(key, 4)

    x = jax.random.normal(kx, (B, T, C), dtype=jnp.float32)
    # nn.Linear(n_embeds, head_size, bias=False).weight has shape (H, C);
    # we store the transpose (C, H) for x @ W.  Deterministic init ~ U(-s, s).
    s = 1.0 / (C ** 0.5)
    w_key = jax.random.uniform(kk, (C, head_size), jnp.float32, -s, s)
    w_query = jax.random.uniform(kq, (C, head_size), jnp.float32, -s, s)
    w_value = jax.random.uniform(kv, (C, head_size), jnp.float32, -s, s)

    # Weight fusion/padding/cast hoisted out of the forward path (do this once).
    w_qkv, H = prepare_head_weights(w_key, w_query, w_value)

    out = head_forward(x, w_qkv, H)
    out = jax.block_until_ready(out)

    ref = head_reference(x, w_key, w_query, w_value)
    assert out.shape == (B, T, head_size)
    # bf16 MXU operands (x, weights, probabilities) -> loosened tolerance vs f32 reference
    assert jnp.allclose(out, ref, atol=3e-2, rtol=3e-2), "mismatch vs reference"

    print("KERNEL_OK")
</pallas_src>

<mosaic_0001>
module attributes {stable_mosaic.version = 11 : i64} {
  func.func @_head_kernel(%arg0: i32, %arg1: memref<8x384xbf16, #tpu.memory_space<vmem>>, %arg2: memref<384x384xbf16, #tpu.memory_space<vmem>>, %arg3: memref<1x8x64xf32, #tpu.memory_space<vmem>>) attributes {dimension_semantics = [#tpu.dimension_semantics<parallel>], iteration_bounds = array<i64: 2>, scalar_prefetch = 0 : i64, scratch_operands = 0 : i64, tpu.core_type = #tpu.core_type<tc>, window_params = [{transform_indices = @transform_0, window_bounds = array<i64: 8, 384>}, {pipeline_mode = #tpu.pipeline_mode<synchronous>, transform_indices = @transform_1, window_bounds = array<i64: 384, 384>}, {transform_indices = @transform_2, window_bounds = array<i64: 1, 8, 64>}]} {
    %c0 = arith.constant 0 : index
    %c0_0 = arith.constant 0 : index
    %0 = vector.load %arg1[%c0, %c0_0] : memref<8x384xbf16, #tpu.memory_space<vmem>>, vector<8x384xbf16>
    %c0_1 = arith.constant 0 : index
    %c0_2 = arith.constant 0 : index
    %1 = vector.load %arg2[%c0_1, %c0_2] : memref<384x384xbf16, #tpu.memory_space<vmem>>, vector<384x384xbf16>
    %cst = arith.constant dense<0.000000e+00> : vector<8x384xf32>
    %2 = tpu.matmul %0, %1, %cst {dimension_numbers = #tpu.dot_dimension_numbers<[1], [0], [0], [1], [0, 0, 1, 1], [], []>} : vector<8x384xbf16>, vector<384x384xbf16>, vector<8x384xf32> -> vector<8x384xf32>
    %3 = vector.shape_cast %2 : vector<8x384xf32> to vector<1x8x384xf32>
    %4 = vector.extract_strided_slice %3 {offsets = [0, 0, 0], sizes = [1, 8, 128], strides = [1, 1, 1]} : vector<1x8x384xf32> to vector<1x8x128xf32>
    %5 = arith.truncf %4 : vector<1x8x128xf32> to vector<1x8x128xbf16>
    %6 = vector.extract_strided_slice %3 {offsets = [0, 0, 128], sizes = [1, 8, 128], strides = [1, 1, 1]} : vector<1x8x384xf32> to vector<1x8x128xf32>
    %cst_3 = arith.constant 0.0510310382 : f32
    %7 = vector.broadcast %cst_3 : f32 to vector<1x8x128xf32>
    %8 = arith.mulf %6, %7 : vector<1x8x128xf32>
    %9 = arith.truncf %8 : vector<1x8x128xf32> to vector<1x8x128xbf16>
    %10 = vector.extract_strided_slice %3 {offsets = [0, 0, 256], sizes = [1, 8, 128], strides = [1, 1, 1]} : vector<1x8x384xf32> to vector<1x8x128xf32>
    %11 = arith.truncf %10 : vector<1x8x128xf32> to vector<1x8x128xbf16>
    "tpu.trace_start"() <{level = 10 : i32, message = "bqd,bkd->bqk"}> : () -> ()
    %cst_4 = arith.constant dense<0.000000e+00> : vector<1x8x8xf32>
    %12 = tpu.matmul %9, %5, %cst_4 {dimension_numbers = #tpu.dot_dimension_numbers<[2], [2], [1], [1], [0, 0, 0, 1, 1, 1], [0], [0]>} : vector<1x8x128xbf16>, vector<1x8x128xbf16>, vector<1x8x8xf32> -> vector<1x8x8xf32>
    "tpu.trace_stop"() : () -> ()
    %13 = tpu.iota {dimensions = array<i32: 0>} : vector<8x8xi32>
    %14 = tpu.iota {dimensions = array<i32: 1>} : vector<8x8xi32>
    %15 = arith.cmpi sle, %14, %13 : vector<8x8xi32>
    %16 = vector.shape_cast %15 : vector<8x8xi1> to vector<1x8x8xi1>
    %cst_5 = arith.constant 0xFF800000 : f32
    %17 = vector.broadcast %cst_5 : f32 to vector<1x8x8xf32>
    %18 = arith.select %16, %12, %17 : vector<1x8x8xi1>, vector<1x8x8xf32>
    %cst_6 = arith.constant dense<0xFF800000> : vector<1x8xf32>
    %19 = vector.multi_reduction <maximumf>, %18, %cst_6 [2] : vector<1x8x8xf32> to vector<1x8xf32>
    %20 = vector.shape_cast %19 : vector<1x8xf32> to vector<1x8x1xf32>
    %21 = vector.broadcast %20 : vector<1x8x1xf32> to vector<1x8x8xf32>
    %22 = arith.subf %18, %21 : vector<1x8x8xf32>
    %23 = math.exp %22 : vector<1x8x8xf32>
    %cst_7 = arith.constant dense<0.000000e+00> : vector<1x8xf32>
    %24 = vector.multi_reduction <add>, %23, %cst_7 [2] : vector<1x8x8xf32> to vector<1x8xf32>
    %25 = vector.shape_cast %24 : vector<1x8xf32> to vector<1x8x1xf32>
    %26 = tpu.reciprocal %25 : vector<1x8x1xf32> -> vector<1x8x1xf32>
    %27 = vector.broadcast %26 : vector<1x8x1xf32> to vector<1x8x8xf32>
    %28 = arith.mulf %23, %27 : vector<1x8x8xf32>
    %29 = arith.truncf %28 : vector<1x8x8xf32> to vector<1x8x8xbf16>
    "tpu.trace_start"() <{level = 10 : i32, message = "bqk,bkd->bqd"}> : () -> ()
    %cst_8 = arith.constant dense<0.000000e+00> : vector<1x8x128xf32>
    %30 = tpu.matmul %29, %11, %cst_8 {dimension_numbers = #tpu.dot_dimension_numbers<[2], [1], [1], [2], [0, 0, 0, 1, 1, 2], [0], [0]>} : vector<1x8x8xbf16>, vector<1x8x128xbf16>, vector<1x8x128xf32> -> vector<1x8x128xf32>
    "tpu.trace_stop"() : () -> ()
    %31 = vector.extract_strided_slice %30 {offsets = [0, 0, 0], sizes = [1, 8, 64], strides = [1, 1, 1]} : vector<1x8x128xf32> to vector<1x8x64xf32>
    %c0_9 = arith.constant 0 : index
    %c0_10 = arith.constant 0 : index
    %c0_11 = arith.constant 0 : index
    %32 = vector.load %arg3[%c0_9, %c0_10, %c0_11] : memref<1x8x64xf32, #tpu.memory_space<vmem>>, vector<1x8x64xf32>
    tpu.vector_store %arg3[%c0_9, %c0_10, %c0_11], %31 {strides = array<i32>} : memref<1x8x64xf32, #tpu.memory_space<vmem>>, vector<1x8x64xf32>,
    return
  }
  func.func @transform_0(%arg0: i32) -> (i32, i32) {
    %c0_i32 = arith.constant 0 : i32
    %c0_i32_0 = arith.constant 0 : i32
    return %arg0, %c0_i32 : i32, i32
  }
  func.func @transform_1(%arg0: i32) -> (i32, i32) {
    %c0_i32 = arith.constant 0 : i32
    %c0_i32_0 = arith.constant 0 : i32
    %c0_i32_1 = arith.constant 0 : i32
    return %c0_i32, %c0_i32_0 : i32, i32
  }
  func.func @transform_2(%arg0: i32) -> (i32, i32, i32) {
    %c0_i32 = arith.constant 0 : i32
    %c0_i32_0 = arith.constant 0 : i32
    %c0_i32_1 = arith.constant 0 : i32
    return %arg0, %c0_i32, %c0_i32_0 : i32, i32, i32
  }
}

</mosaic_0001>

<llo_original>
// kernel: tpu_custom_call.1
$region0: #{tpu_custom_call.1}
  #allocation0 [shape = 'u32[]', space=smem, size = 0x4, offset = 0x4, fixed_abs, tag = 'smem constant byte address 0x4 - core index']
  #allocation1 [shape = 'u32[144,128]{1,0:T(1,128)}', space=vmem, size = 0x12000, scoped, tag = 'internal scratch']
  %s0 = inlined_call_operand.hbm [shape: bf16[16,384], index: 0, kind: input, shape index: {}]
  %s1 = inlined_call_operand.hbm [shape: bf16[384,384], index: 1, kind: input, shape index: {}]
  %s2 = inlined_call_operand.hbm [shape: f32[2,8,64], index: 2, kind: output, shape index: {}]
  %s3 = sld [smem:[#allocation0]]
  $region49: #{tpu_custom_call.1} parent=0
    _
  %s5 = ssub.s32 1, %s3
  %s6 = scalar_select 0, %s5, %s3
  $region1: #{tpu_custom_call.1} parent=0
    #allocation2 [shape = 'u8[12288]{0}', space=vmem, size = 0x3000, scoped, tag = 'input window, operand 0']
    #allocation3 [shape = 's32[2]{0}', space=sflag, size = 0x8, scoped, tag = 'scoped memory for tpu_custom_call.1']
    #allocation4 [shape = 's32[2]{0}', space=sflag, size = 0x8, scoped, tag = 'scoped memory for tpu_custom_call.1']
    #allocation5 [shape = 'u8[294912]{0}', space=vmem, size = 0x48000, scoped, tag = 'input window, operand 1, single buffered']
    #allocation6 [shape = 's32[1]{0}', space=sflag, size = 0x4, scoped, tag = 'scoped memory for tpu_custom_call.1']
    #allocation7 [shape = 'u8[8192]{0}', space=vmem, size = 0x2000, scoped, tag = 'output window, operand 0']
    %7 = vsyncpa [#allocation3], 0
    %s8 = scalar_lea.sflag [#allocation3], 1
    %9 = vsyncpa %s8, 0
    %10 = vsyncpa [#allocation6], 0
    %11 = vsyncpa [#allocation4], 0
    %s12 = scalar_lea.sflag [#allocation4], 1
    %13 = vsyncpa %s12, 0
    loop: start=0, step=1, limit=4
    $region2: #{tpu_custom_call.1} parent=1 // loop_pre_header
      _
    $region3: #{tpu_custom_call.1} parent=1 // loop_header
      %s15 = sphi 0, %s19
      %p16 = scmp.ge.s32.totalorder %s15, 4
      %s25 = sphi 0, %s27
      %s28 = sphi 0, %s25
      %s29 = sphi 0, %s28
      %s45 = sphi 0, %s29
      %s49 = sphi 0, %s49
      %s51 = sphi 0, %s49
      %s52 = sphi 0, %s51
      %s66 = sphi 0, %s52
      %s72 = sphi 0, %s74
      %s75 = sphi 0, %s72
      %s76 = sphi 0, %s75
      %s92 = sphi 0, %s76
    $region4: #{tpu_custom_call.1} parent=1 // loop_header_branch
      %18 = sbr.rel (%p16) target = $region8
    $region5: #{tpu_custom_call.1} parent=1 // loop_body
      %s20 = ssub.s32 %s15, 1
      %s21 = ssub.s32 %s15, 2
      %s22 = sadd.s32 %s15, 1
      %s23 = ssub.s32 %s15, %s22
      %p24 = scmp.eq.s32.totalorder %s23, 0
      %s26 = sadd.s32 %s25, 1
      %s27 = scalar_select %p24, %s25, %s26
      %p30 = pneg %p24
      %p31 = scmp.eq.s32.totalorder %s15, 1
      %p32 = por %p30, %p31
      %p33 = scmp.ne.s32.totalorder %s25, %s28
      %p34 = scmp.eq.s32.totalorder %s15, 0
      %p35 = por %p33, %p34
      %p36 = scmp.ne.s32.totalorder %s25, %s28
      %p37 = scmp.eq.s32.totalorder %s20, 1
      %p38 = por %p36, %p37
      %p39 = scmp.ne.s32.totalorder %s28, %s29
      %p40 = scmp.eq.s32.totalorder %s20, 0
      %p41 = por %p39, %p40
      %p42 = scmp.ne.s32.totalorder %s28, %s29
      %p43 = scmp.eq.s32.totalorder %s21, 1
      %p44 = por %p42, %p43
      %p46 = scmp.ne.s32.totalorder %s29, %s45
      %p47 = scmp.eq.s32.totalorder %s21, 0
      %p48 = por %p46, %p47
      %s50 = sadd.s32 %s49, 1
      %p53 = scmp.eq.s32.totalorder %s15, 1
      %p54 = scmp.ne.s32.totalorder %s49, %s51
      %p55 = scmp.eq.s32.totalorder %s15, 0
      %p56 = por %p54, %p55
      %p57 = scmp.ne.s32.totalorder %s49, %s51
      %p58 = scmp.eq.s32.totalorder %s20, 1
      %p59 = por %p57, %p58
      %p60 = scmp.ne.s32.totalorder %s51, %s52
      %p61 = scmp.eq.s32.totalorder %s20, 0
      %p62 = por %p60, %p61
      %p63 = scmp.ne.s32.totalorder %s51, %s52
      %p64 = scmp.eq.s32.totalorder %s21, 1
      %p65 = por %p63, %p64
      %p67 = scmp.ne.s32.totalorder %s52, %s66
      %p68 = scmp.eq.s32.totalorder %s21, 0
      %p69 = por %p67, %p68
      %s70 = ssub.s32 %s15, %s22
      %p71 = scmp.eq.s32.totalorder %s70, 0
      %s73 = sadd.s32 %s72, 1
      %s74 = scalar_select %p71, %s72, %s73
      %p77 = pneg %p71
      %p78 = scmp.eq.s32.totalorder %s15, 1
      %p79 = por %p77, %p78
      %p80 = scmp.ne.s32.totalorder %s72, %s75
      %p81 = scmp.eq.s32.totalorder %s15, 0
      %p82 = por %p80, %p81
      %p83 = scmp.ne.s32.totalorder %s72, %s75
      %p84 = scmp.eq.s32.totalorder %s20, 1
      %p85 = por %p83, %p84
      %p86 = scmp.ne.s32.totalorder %s75, %s76
      %p87 = scmp.eq.s32.totalorder %s20, 0
      %p88 = por %p86, %p87
      %p89 = scmp.ne.s32.totalorder %s75, %s76
      %p90 = scmp.eq.s32.totalorder %s21, 1
      %p91 = por %p89, %p90
      %p93 = scmp.ne.s32.totalorder %s76, %s92
      %p94 = scmp.eq.s32.totalorder %s21, 0
      %p95 = por %p93, %p94
      %p96 = scmp.le.s32.totalorder 1, %s15
      %p97 = scmp.lt.s32.totalorder %s15, 3
      %p98 = pnand %p96, %p97
      %p99 = pneg %p98
      // Predicated region
      $region9: #{tpu_custom_call.1} parent=5 // pred_check
        _
      $region10: #{tpu_custom_call.1} parent=5 // pred_check_branch
        %101 = sbr.rel (%p98) target = $region12
      $region11: #{tpu_custom_call.1} parent=5 // pred_region
        %s102 = ssub.s32 %s15, 1
        // Predicated region
        $region13: #{tpu_custom_call.1} parent=11 // pred_check
          %p103 = pneg %p62
        $region14: #{tpu_custom_call.1} parent=11 // pred_check_branch
          %105 = sbr.rel (%p103) target = $region16
        $region15: #{tpu_custom_call.1} parent=11 // pred_region
          %s107 = ssub.s32 9216, 9216
          %108 = vsyncadd [#allocation6], %s107
          %s109 = sshll.u32 [#allocation5], 4
          %s110 = int_to_ptr.vmem [resolvable:$true] %s109
          %115 = dma.hbm_to_vmem [thread:$0]  %s1, 9216, %s110, [#allocation6], 192, 192, 12
        $region16: #{tpu_custom_call.1} parent=11 // pred_fallthru
          _
      $region12: #{tpu_custom_call.1} parent=5 // pred_fallthru
        _
      %p116 = scmp.lt.s32.totalorder %s15, 2
      // Predicated region
      $region17: #{tpu_custom_call.1} parent=5 // pred_check
        %p117 = pneg %p116
      $region18: #{tpu_custom_call.1} parent=5 // pred_check_branch
        %119 = sbr.rel (%p117) target = $region20
      $region19: #{tpu_custom_call.1} parent=5 // pred_region
        // Predicated region
        $region21: #{tpu_custom_call.1} parent=19 // pred_check
          %p120 = pneg %p35
        $region22: #{tpu_custom_call.1} parent=19 // pred_check_branch
          %122 = sbr.rel (%p120) target = $region24
        $region23: #{tpu_custom_call.1} parent=19 // pred_region
          %s123 = sand.u32 %s25, 1
          %s124 = scalar_lea.sflag [#allocation3], %s123
          %s125 = sand.u32 %s25, 1
          %s126 = smul.addr %s125, 12
          %s127 = scalar_lea.vmem [#allocation2], %s126
          %s129 = ssub.s32 192, 192
          %130 = vsyncadd %s124, %s129
          %s131 = smul.addr %s15, 3
          %s132 = smul.addr %s131, 64
          %s133 = scalar_lea.hbm %s0, %s132
          %s135 = sshll.u32 %s127, 4
          %s136 = int_to_ptr.vmem [resolvable:$true] %s135
          %138 = dma.hbm_to_vmem [thread:$0]  %s133, 192, %s136, %s124
        $region24: #{tpu_custom_call.1} parent=19 // pred_fallthru
          _
      $region20: #{tpu_custom_call.1} parent=5 // pred_fallthru
        _
      %p139 = scmp.le.s32.totalorder 1, %s15
      %p140 = scmp.lt.s32.totalorder %s15, 3
      %p141 = pnand %p139, %p140
      %p142 = pneg %p141
      // Predicated region
      $region25: #{tpu_custom_call.1} parent=5 // pred_check
        _
      $region26: #{tpu_custom_call.1} parent=5 // pred_check_branch
        %144 = sbr.rel (%p141) target = $region28
      $region27: #{tpu_custom_call.1} parent=5 // pred_region
        %s145 = ssub.s32 %s15, 1
        %s146 = sand.u32 %s28, 1
        %s147 = scalar_lea.sflag [#allocation3], %s146
        %s148 = sand.u32 %s28, 1
        %s149 = smul.addr %s148, 12
        %s150 = scalar_lea.vmem [#allocation2], %s149
        // Predicated region
        $region29: #{tpu_custom_call.1} parent=27 // pred_check
          %p151 = pneg %p41
        $region30: #{tpu_custom_call.1} parent=27 // pred_check_branch
          %153 = sbr.rel (%p151) target = $region32
        $region31: #{tpu_custom_call.1} parent=27 // pred_region
          %154 = dma.done %s147, 192
        $region32: #{tpu_custom_call.1} parent=27 // pred_fallthru
          _
        // Predicated region
        $region33: #{tpu_custom_call.1} parent=27 // pred_check
          %p155 = pneg %p62
        $region34: #{tpu_custom_call.1} parent=27 // pred_check_branch
          %157 = sbr.rel (%p155) target = $region36
        $region35: #{tpu_custom_call.1} parent=27 // pred_region
          %158 = dma.done [#allocation6], 9216
        $region36: #{tpu_custom_call.1} parent=27 // pred_fallthru
          _
        %s159 = sand.u32 %s28, 1
        %s160 = scalar_lea.sflag [#allocation3], %s159
        %s161 = sand.u32 %s28, 1
        %s162 = smul.addr %s161, 12
        %s163 = scalar_lea.vmem [#allocation2], %s162
        %p164 = pneg %p41
        %p165 = pneg %p38
        %p166 = pneg %p62
        %p167 = pneg %p59
        %p168 = pneg %p88
        %p169 = pneg %p85
        %s170 = sand.u32 %s75, 1
        %s171 = scalar_lea.sflag [#allocation4], %s170
        %s172 = sand.u32 %s75, 1
        %s173 = smul.addr %s172, 8
        %s174 = scalar_lea.vmem [#allocation7], %s173
        %v176 = vld [vmem:[%s150] sm:$0xff]
        %v177 = vld [vmem:[%s150 + $0x8] sm:$0xf]
        %v178 = vld [vmem:[#allocation5] sm:$0xff]
        %v179 = vld [vmem:[#allocation5 + $0x8] sm:$0xf]
        %v180 = vld [vmem:[#allocation5 + $0xc] sm:$0xff]
        %v181 = vld [vmem:[#allocation5 + $0x14] sm:$0xf]
        %v182 = vld [vmem:[#allocation5 + $0x18] sm:$0xff]
        %v183 = vld [vmem:[#allocation5 + $0x20] sm:$0xf]
        %v184 = vld [vmem:[#allocation5 + $0x24] sm:$0xff]
        %v185 = vld [vmem:[#allocation5 + $0x2c] sm:$0xf]
        %v186 = vld [vmem:[#allocation5 + $0x30] sm:$0xff]
        %v187 = vld [vmem:[#allocation5 + $0x38] sm:$0xf]
        %v188 = vld [vmem:[#allocation5 + $0x3c] sm:$0xff]
        %v189 = vld [vmem:[#allocation5 + $0x44] sm:$0xf]
        %v190 = vld [vmem:[#allocation5 + $0x48] sm:$0xff]
        %v191 = vld [vmem:[#allocation5 + $0x50] sm:$0xf]
        %v192 = vld [vmem:[#allocation5 + $0x54] sm:$0xff]
        %v193 = vld [vmem:[#allocation5 + $0x5c] sm:$0xf]
        %v194 = vld [vmem:[#allocation5 + $0x60] sm:$0xff]
        %v195 = vld [vmem:[#allocation5 + $0x68] sm:$0xf]
        %v196 = vld [vmem:[#allocation5 + $0x6c] sm:$0xff]
        %v197 = vld [vmem:[#allocation5 + $0x74] sm:$0xf]
        %v198 = vld [vmem:[#allocation5 + $0x78] sm:$0xff]
        %v199 = vld [vmem:[#allocation5 + $0x80] sm:$0xf]
        %v200 = vld [vmem:[#allocation5 + $0x84] sm:$0xff]
        %v201 = vld [vmem:[#allocation5 + $0x8c] sm:$0xf]
        %v202 = vld [vmem:[#allocation5 + $0x90] sm:$0xff]
        %v203 = vld [vmem:[#allocation5 + $0x98] sm:$0xf]
        %v204 = vld [vmem:[#allocation5 + $0x9c] sm:$0xff]
        %v205 = vld [vmem:[#allocation5 + $0xa4] sm:$0xf]
        %v206 = vld [vmem:[#allocation5 + $0xa8] sm:$0xff]
        %v207 = vld [vmem:[#allocation5 + $0xb0] sm:$0xf]
        %v208 = vld [vmem:[#allocation5 + $0xb4] sm:$0xff]
        %v209 = vld [vmem:[#allocation5 + $0xbc] sm:$0xf]
        %v210 = vld [vmem:[#allocation5 + $0xc0] sm:$0xff]
        %v211 = vld [vmem:[#allocation5 + $0xc8] sm:$0xf]
        %v212 = vld [vmem:[#allocation5 + $0xcc] sm:$0xff]
        %v213 = vld [vmem:[#allocation5 + $0xd4] sm:$0xf]
        %v214 = vld [vmem:[#allocation5 + $0xd8] sm:$0xff]
        %v215 = vld [vmem:[#allocation5 + $0xe0] sm:$0xf]
        %v216 = vld [vmem:[#allocation5 + $0xe4] sm:$0xff]
        %v217 = vld [vmem:[#allocation5 + $0xec] sm:$0xf]
        %v218 = vld [vmem:[#allocation5 + $0xf0] sm:$0xff]
        %v219 = vld [vmem:[#allocation5 + $0xf8] sm:$0xf]
        %v220 = vld [vmem:[#allocation5 + $0xfc] sm:$0xff]
        %v221 = vld [vmem:[#allocation5 + $0x104] sm:$0xf]
        %v222 = vld [vmem:[#allocation5 + $0x108] sm:$0xff]
        %v223 = vld [vmem:[#allocation5 + $0x110] sm:$0xf]
        %v224 = vld [vmem:[#allocation5 + $0x114] sm:$0xff]
        %v225 = vld [vmem:[#allocation5 + $0x11c] sm:$0xf]
        %v226 = vld [vmem:[#allocation5 + $0x120] sm:$0xff]
        %v227 = vld [vmem:[#allocation5 + $0x128] sm:$0xf]
        %v228 = vld [vmem:[#allocation5 + $0x12c] sm:$0xff]
        %v229 = vld [vmem:[#allocation5 + $0x134] sm:$0xf]
        %v230 = vld [vmem:[#allocation5 + $0x138] sm:$0xff]
        %v231 = vld [vmem:[#allocation5 + $0x140] sm:$0xf]
        %v232 = vld [vmem:[#allocation5 + $0x144] sm:$0xff]
        %v233 = vld [vmem:[#allocation5 + $0x14c] sm:$0xf]
        %v234 = vld [vmem:[#allocation5 + $0x150] sm:$0xff]
        %v235 = vld [vmem:[#allocation5 + $0x158] sm:$0xf]
        %v236 = vld [vmem:[#allocation5 + $0x15c] sm:$0xff]
        %v237 = vld [vmem:[#allocation5 + $0x164] sm:$0xf]
        %v238 = vld [vmem:[#allocation5 + $0x168] sm:$0xff]
        %v239 = vld [vmem:[#allocation5 + $0x170] sm:$0xf]
        %v240 = vld [vmem:[#allocation5 + $0x174] sm:$0xff]
        %v241 = vld [vmem:[#allocation5 + $0x17c] sm:$0xf]
        %v242 = vld [vmem:[#allocation5 + $0x180] sm:$0xff]
        %v243 = vld [vmem:[#allocation5 + $0x188] sm:$0xf]
        %v244 = vld [vmem:[#allocation5 + $0x18c] sm:$0xff]
        %v245 = vld [vmem:[#allocation5 + $0x194] sm:$0xf]
        %v246 = vld [vmem:[#allocation5 + $0x198] sm:$0xff]
        %v247 = vld [vmem:[#allocation5 + $0x1a0] sm:$0xf]
        %v248 = vld [vmem:[#allocation5 + $0x1a4] sm:$0xff]
        %v249 = vld [vmem:[#allocation5 + $0x1ac] sm:$0xf]
        %v250 = vld [vmem:[#allocation5 + $0x1b0] sm:$0xff]
        %v251 = vld [vmem:[#allocation5 + $0x1b8] sm:$0xf]
        %v252 = vld [vmem:[#allocation5 + $0x1bc] sm:$0xff]
        %v253 = vld [vmem:[#allocation5 + $0x1c4] sm:$0xf]
        %v254 = vld [vmem:[#allocation5 + $0x1c8] sm:$0xff]
        %v255 = vld [vmem:[#allocation5 + $0x1d0] sm:$0xf]
        %v256 = vld [vmem:[#allocation5 + $0x1d4] sm:$0xff]
        %v257 = vld [vmem:[#allocation5 + $0x1dc] sm:$0xf]
        %v258 = vld [vmem:[#allocation5 + $0x1e0] sm:$0xff]
        %v259 = vld [vmem:[#allocation5 + $0x1e8] sm:$0xf]
        %v260 = vld [vmem:[#allocation5 + $0x1ec] sm:$0xff]
        %v261 = vld [vmem:[#allocation5 + $0x1f4] sm:$0xf]
        %v262 = vld [vmem:[#allocation5 + $0x1f8] sm:$0xff]
        %v263 = vld [vmem:[#allocation5 + $0x200] sm:$0xf]
        %v264 = vld [vmem:[#allocation5 + $0x204] sm:$0xff]
        %v265 = vld [vmem:[#allocation5 + $0x20c] sm:$0xf]
        %v266 = vld [vmem:[#allocation5 + $0x210] sm:$0xff]
        %v267 = vld [vmem:[#allocation5 + $0x218] sm:$0xf]
        %v268 = vld [vmem:[#allocation5 + $0x21c] sm:$0xff]
        %v269 = vld [vmem:[#allocation5 + $0x224] sm:$0xf]
        %v270 = vld [vmem:[#allocation5 + $0x228] sm:$0xff]
        %v271 = vld [vmem:[#allocation5 + $0x230] sm:$0xf]
        %v272 = vld [vmem:[#allocation5 + $0x234] sm:$0xff]
        %v273 = vld [vmem:[#allocation5 + $0x23c] sm:$0xf]
        %v276 = vunpack.c.l.b16 %v176
        %v277 = vunpack.c.h.b16 %v176
        %v278 = vunpack.c.l.b16 %v177
        %v279 = vpack.c.b16 %v276, %v276
        %v280 = vpack.c.b16 %v277, %v277
        %v281 = vpack.c.b16 %v278, %v278
        %v381 = vunpack.c.l.b16 %v178
        %v382 = vunpack.c.h.b16 %v178
        %v383 = vunpack.c.l.b16 %v179
        %v384 = vunpack.c.l.b16 %v180
        %v385 = vunpack.c.h.b16 %v180
        %v386 = vunpack.c.l.b16 %v181
        %v387 = vunpack.c.l.b16 %v182
        %v388 = vunpack.c.h.b16 %v182
        %v389 = vunpack.c.l.b16 %v183
        %v390 = vunpack.c.l.b16 %v184
        %v391 = vunpack.c.h.b16 %v184
        %v392 = vunpack.c.l.b16 %v185
        %v393 = vunpack.c.l.b16 %v186
        %v394 = vunpack.c.h.b16 %v186
        %v395 = vunpack.c.l.b16 %v187
        %v396 = vunpack.c.l.b16 %v188
        %v397 = vunpack.c.h.b16 %v188
        %v398 = vunpack.c.l.b16 %v189
        %v399 = vunpack.c.l.b16 %v190
        %v400 = vunpack.c.h.b16 %v190
        %v401 = vunpack.c.l.b16 %v191
        %v402 = vunpack.c.l.b16 %v192
        %v403 = vunpack.c.h.b16 %v192
        %v404 = vunpack.c.l.b16 %v193
        %v405 = vunpack.c.l.b16 %v194
        %v406 = vunpack.c.h.b16 %v194
        %v407 = vunpack.c.l.b16 %v195
        %v408 = vunpack.c.l.b16 %v196
        %v409 = vunpack.c.h.b16 %v196
        %v410 = vunpack.c.l.b16 %v197
        %v411 = vunpack.c.l.b16 %v198
        %v412 = vunpack.c.h.b16 %v198
        %v413 = vunpack.c.l.b16 %v199
        %v414 = vunpack.c.l.b16 %v200
        %v415 = vunpack.c.h.b16 %v200
        %v416 = vunpack.c.l.b16 %v201
        %v417 = vunpack.c.l.b16 %v202
        %v418 = vunpack.c.h.b16 %v202
        %v419 = vunpack.c.l.b16 %v203
        %v420 = vunpack.c.l.b16 %v204
        %v421 = vunpack.c.h.b16 %v204
        %v422 = vunpack.c.l.b16 %v205
        %v423 = vunpack.c.l.b16 %v206
        %v424 = vunpack.c.h.b16 %v206
        %v425 = vunpack.c.l.b16 %v207
        %v426 = vunpack.c.l.b16 %v208
        %v427 = vunpack.c.h.b16 %v208
        %v428 = vunpack.c.l.b16 %v209
        %v429 = vunpack.c.l.b16 %v210
        %v430 = vunpack.c.h.b16 %v210
        %v431 = vunpack.c.l.b16 %v211
        %v432 = vunpack.c.l.b16 %v212
        %v433 = vunpack.c.h.b16 %v212
        %v434 = vunpack.c.l.b16 %v213
        %v435 = vunpack.c.l.b16 %v214
        %v436 = vunpack.c.h.b16 %v214
        %v437 = vunpack.c.l.b16 %v215
        %v438 = vunpack.c.l.b16 %v216
        %v439 = vunpack.c.h.b16 %v216
        %v440 = vunpack.c.l.b16 %v217
        %v441 = vunpack.c.l.b16 %v218
        %v442 = vunpack.c.h.b16 %v218
        %v443 = vunpack.c.l.b16 %v219
        %v444 = vunpack.c.l.b16 %v220
        %v445 = vunpack.c.h.b16 %v220
        %v446 = vunpack.c.l.b16 %v221
        %v447 = vunpack.c.l.b16 %v222
        %v448 = vunpack.c.h.b16 %v222
        %v449 = vunpack.c.l.b16 %v223
        %v450 = vunpack.c.l.b16 %v224
        %v451 = vunpack.c.h.b16 %v224
        %v452 = vunpack.c.l.b16 %v225
        %v453 = vunpack.c.l.b16 %v226
        %v454 = vunpack.c.h.b16 %v226
        %v455 = vunpack.c.l.b16 %v227
        %v456 = vunpack.c.l.b16 %v228
        %v457 = vunpack.c.h.b16 %v228
        %v458 = vunpack.c.l.b16 %v229
        %v459 = vunpack.c.l.b16 %v230
        %v460 = vunpack.c.h.b16 %v230
        %v461 = vunpack.c.l.b16 %v231
        %v462 = vunpack.c.l.b16 %v232
        %v463 = vunpack.c.h.b16 %v232
        %v464 = vunpack.c.l.b16 %v233
        %v465 = vunpack.c.l.b16 %v234
        %v466 = vunpack.c.h.b16 %v234
        %v467 = vunpack.c.l.b16 %v235
        %v468 = vunpack.c.l.b16 %v236
        %v469 = vunpack.c.h.b16 %v236
        %v470 = vunpack.c.l.b16 %v237
        %v471 = vunpack.c.l.b16 %v238
        %v472 = vunpack.c.h.b16 %v238
        %v473 = vunpack.c.l.b16 %v239
        %v474 = vunpack.c.l.b16 %v240
        %v475 = vunpack.c.h.b16 %v240
        %v476 = vunpack.c.l.b16 %v241
        %v477 = vunpack.c.l.b16 %v242
        %v478 = vunpack.c.h.b16 %v242
        %v479 = vunpack.c.l.b16 %v243
        %v480 = vunpack.c.l.b16 %v244
        %v481 = vunpack.c.h.b16 %v244
        %v482 = vunpack.c.l.b16 %v245
        %v483 = vunpack.c.l.b16 %v246
        %v484 = vunpack.c.h.b16 %v246
        %v485 = vunpack.c.l.b16 %v247
        %v486 = vunpack.c.l.b16 %v248
        %v487 = vunpack.c.h.b16 %v248
        %v488 = vunpack.c.l.b16 %v249
        %v489 = vunpack.c.l.b16 %v250
        %v490 = vunpack.c.h.b16 %v250
        %v491 = vunpack.c.l.b16 %v251
        %v492 = vunpack.c.l.b16 %v252
        %v493 = vunpack.c.h.b16 %v252
        %v494 = vunpack.c.l.b16 %v253
        %v495 = vunpack.c.l.b16 %v254
        %v496 = vunpack.c.h.b16 %v254
        %v497 = vunpack.c.l.b16 %v255
        %v498 = vunpack.c.l.b16 %v256
        %v499 = vunpack.c.h.b16 %v256
        %v500 = vunpack.c.l.b16 %v257
        %v501 = vunpack.c.l.b16 %v258
        %v502 = vunpack.c.h.b16 %v258
        %v503 = vunpack.c.l.b16 %v259
        %v504 = vunpack.c.l.b16 %v260
        %v505 = vunpack.c.h.b16 %v260
        %v506 = vunpack.c.l.b16 %v261
        %v507 = vunpack.c.l.b16 %v262
        %v508 = vunpack.c.h.b16 %v262
        %v509 = vunpack.c.l.b16 %v263
        %v510 = vunpack.c.l.b16 %v264
        %v511 = vunpack.c.h.b16 %v264
        %v512 = vunpack.c.l.b16 %v265
        %v513 = vunpack.c.l.b16 %v266
        %v514 = vunpack.c.h.b16 %v266
        %v515 = vunpack.c.l.b16 %v267
        %v516 = vunpack.c.l.b16 %v268
        %v517 = vunpack.c.h.b16 %v268
        %v518 = vunpack.c.l.b16 %v269
        %v519 = vunpack.c.l.b16 %v270
        %v520 = vunpack.c.h.b16 %v270
        %v521 = vunpack.c.l.b16 %v271
        %v522 = vunpack.c.l.b16 %v272
        %v523 = vunpack.c.h.b16 %v272
        %v524 = vunpack.c.l.b16 %v273
        %v525 = vpack.c.b16 %v384, %v381
        %v526 = vpack.c.b16 %v385, %v382
        %v527 = vpack.c.b16 %v386, %v383
        %v528 = vpack.c.b16 %v390, %v387
        %v529 = vpack.c.b16 %v391, %v388
        %v530 = vpack.c.b16 %v392, %v389
        %v531 = vpack.c.b16 %v396, %v393
        %v532 = vpack.c.b16 %v397, %v394
        %v533 = vpack.c.b16 %v398, %v395
        %v534 = vpack.c.b16 %v402, %v399
        %v535 = vpack.c.b16 %v403, %v400
        %v536 = vpack.c.b16 %v404, %v401
        %v537 = vpack.c.b16 %v408, %v405
        %v538 = vpack.c.b16 %v409, %v406
        %v539 = vpack.c.b16 %v410, %v407
        %v540 = vpack.c.b16 %v414, %v411
        %v541 = vpack.c.b16 %v415, %v412
        %v542 = vpack.c.b16 %v416, %v413
        %v543 = vpack.c.b16 %v420, %v417
        %v544 = vpack.c.b16 %v421, %v418
        %v545 = vpack.c.b16 %v422, %v419
        %v546 = vpack.c.b16 %v426, %v423
        %v547 = vpack.c.b16 %v427, %v424
        %v548 = vpack.c.b16 %v428, %v425
        %v549 = vpack.c.b16 %v432, %v429
        %v550 = vpack.c.b16 %v433, %v430
        %v551 = vpack.c.b16 %v434, %v431
        %v552 = vpack.c.b16 %v438, %v435
        %v553 = vpack.c.b16 %v439, %v436
        %v554 = vpack.c.b16 %v440, %v437
        %v555 = vpack.c.b16 %v444, %v441
        %v556 = vpack.c.b16 %v445, %v442
        %v557 = vpack.c.b16 %v446, %v443
        %v558 = vpack.c.b16 %v450, %v447
        %v559 = vpack.c.b16 %v451, %v448
        %v560 = vpack.c.b16 %v452, %v449
        %v561 = vpack.c.b16 %v456, %v453
        %v562 = vpack.c.b16 %v457, %v454
        %v563 = vpack.c.b16 %v458, %v455
        %v564 = vpack.c.b16 %v462, %v459
        %v565 = vpack.c.b16 %v463, %v460
        %v566 = vpack.c.b16 %v464, %v461
        %v567 = vpack.c.b16 %v468, %v465
        %v568 = vpack.c.b16 %v469, %v466
        %v569 = vpack.c.b16 %v470, %v467
        %v570 = vpack.c.b16 %v474, %v471
        %v571 = vpack.c.b16 %v475, %v472
        %v572 = vpack.c.b16 %v476, %v473
        %v573 = vpack.c.b16 %v480, %v477
        %v574 = vpack.c.b16 %v481, %v478
        %v575 = vpack.c.b16 %v482, %v479
        %v576 = vpack.c.b16 %v486, %v483
        %v577 = vpack.c.b16 %v487, %v484
        %v578 = vpack.c.b16 %v488, %v485
        %v579 = vpack.c.b16 %v492, %v489
        %v580 = vpack.c.b16 %v493, %v490
        %v581 = vpack.c.b16 %v494, %v491
        %v582 = vpack.c.b16 %v498, %v495
        %v583 = vpack.c.b16 %v499, %v496
        %v584 = vpack.c.b16 %v500, %v497
        %v585 = vpack.c.b16 %v504, %v501
        %v586 = vpack.c.b16 %v505, %v502
        %v587 = vpack.c.b16 %v506, %v503
        %v588 = vpack.c.b16 %v510, %v507
        %v589 = vpack.c.b16 %v511, %v508
        %v590 = vpack.c.b16 %v512, %v509
        %v591 = vpack.c.b16 %v516, %v513
        %v592 = vpack.c.b16 %v517, %v514
        %v593 = vpack.c.b16 %v518, %v515
        %v594 = vpack.c.b16 %v522, %v519
        %v595 = vpack.c.b16 %v523, %v520
        %v596 = vpack.c.b16 %v524, %v521
        %669 = vmatprep.subr.bf16.mxu0 %v526
        %670 = vmatpush1.bf16.msra.mxu0 %v525
        %671 = vmatprep.subr.bf16.mxu0 %v529
        %672 = vmatpush1.bf16.msra.mxu0 %v528
        %673 = vmatprep.subr.bf16.mxu0 %v532
        %674 = vmatpush1.bf16.msra.mxu0 %v531
        %675 = vmatprep.subr.bf16.mxu0 %v535
        %676 = vmatpush1.bf16.msra.mxu0 %v534
        %677 = vmatprep.subr.bf16.mxu0 %v538
        %678 = vmatpush1.bf16.msra.mxu0 %v537
        %679 = vmatprep.subr.bf16.mxu0 %v541
        %680 = vmatpush1.bf16.msra.mxu0 %v540
        %681 = vmatprep.subr.bf16.mxu0 %v544
        %682 = vmatpush1.bf16.msra.mxu0 %v543
        %683 = vmatprep.subr.bf16.mxu0 %v547
        %684 = vmatpush1.bf16.msra.mxu0 %v546
        %685 = vmatprep.subr.bf16.mxu0 %v550
        %686 = vmatpush1.bf16.msra.mxu0 %v549
        %687 = vmatprep.subr.bf16.mxu0 %v553
        %688 = vmatpush1.bf16.msra.mxu0 %v552
        %689 = vmatprep.subr.bf16.mxu0 %v556
        %690 = vmatpush1.bf16.msra.mxu0 %v555
        %691 = vmatprep.subr.bf16.mxu0 %v559
        %692 = vmatpush1.bf16.msra.mxu0 %v558
        %693 = vmatprep.subr.bf16.mxu0 %v562
        %694 = vmatpush1.bf16.msra.mxu0 %v561
        %695 = vmatprep.subr.bf16.mxu0 %v565
        %696 = vmatpush1.bf16.msra.mxu0 %v564
        %697 = vmatprep.subr.bf16.mxu0 %v568
        %698 = vmatpush1.bf16.msra.mxu0 %v567
        %699 = vmatprep.subr.bf16.mxu0 %v571
        %700 = vmatpush1.bf16.msra.mxu0 %v570
        %701 = vmatprep.mubr.bf16.mxu0 %v280
        %702 = vmatmul.mubr.bf16.gmra.mrb[0].mxu0 %v279
        %v703 = vpop.f32.mrb[0].mxu0
        %v704 = vadd.f32 0.0, %v703
        %v705 = vpop.f32.mrb[0].mxu0
        %v706 = vadd.f32 0.0, %v705
        %v707 = vpop.f32.mrb[0].mxu0
        %v708 = vpop.f32.mrb[0].mxu0
        %709 = vdwg.mxu0
        %710 = vmatprep.subr.bf16.mxu0 %v574
        %711 = vmatpush1.bf16.msra.mxu0 %v573
        %712 = vmatprep.subr.bf16.mxu0 %v577
        %713 = vmatpush1.bf16.msra.mxu0 %v576
        %714 = vmatprep.subr.bf16.mxu0 %v580
        %715 = vmatpush1.bf16.msra.mxu0 %v579
        %716 = vmatprep.subr.bf16.mxu0 %v583
        %717 = vmatpush1.bf16.msra.mxu0 %v582
        %718 = vmatprep.subr.bf16.mxu0 %v586
        %719 = vmatpush1.bf16.msra.mxu0 %v585
        %720 = vmatprep.subr.bf16.mxu0 %v589
        %721 = vmatpush1.bf16.msra.mxu0 %v588
        %722 = vmatprep.subr.bf16.mxu0 %v592
        %723 = vmatpush1.bf16.msra.mxu0 %v591
        %724 = vmatprep.subr.bf16.mxu0 %v595
        %725 = vmatpush1.bf16.msra.mxu0 %v594
        %726 = vmatprep.subr.bf16.mxu0 0
        %727 = vmatpush1.bf16.msra.mxu0 0
        %728 = vmatprep.subr.bf16.mxu0 0
        %729 = vmatpush1.bf16.msra.mxu0 0
        %730 = vmatprep.subr.bf16.mxu0 0
        %731 = vmatpush1.bf16.msra.mxu0 0
        %732 = vmatprep.subr.bf16.mxu0 0
        %733 = vmatpush1.bf16.msra.mxu0 0
        %734 = vmatprep.subr.bf16.mxu0 0
        %735 = vmatpush1.bf16.msra.mxu0 0
        %736 = vmatprep.subr.bf16.mxu0 0
        %737 = vmatpush1.bf16.msra.mxu0 0
        %738 = vmatprep.subr.bf16.mxu0 0
        %739 = vmatpush1.bf16.msra.mxu0 0
        %740 = vmatprep.subr.bf16.mxu0 0
        %741 = vmatpush1.bf16.msra.mxu0 0
        %742 = vmatprep.mubr.bf16.mxu0 0
        %743 = vmatmul.mubr.bf16.gmra.mrb[0].mxu0 %v281
        %v744 = vpop.f32.mrb[0].mxu0
        %v745 = vadd.f32 %v704, %v744
        %v746 = vpop.f32.mrb[0].mxu0
        %v747 = vadd.f32 %v706, %v746
        %v748 = vpop.f32.mrb[0].mxu0
        %v749 = vpop.f32.mrb[0].mxu0
        %750 = vdwg.mxu0
        %751 = vmatprep.subr.bf16.mxu0 0
        %752 = vmatpush1.bf16.msra.mxu0 %v527
        %753 = vmatprep.subr.bf16.mxu0 0
        %754 = vmatpush1.bf16.msra.mxu0 %v530
        %755 = vmatprep.subr.bf16.mxu0 0
        %756 = vmatpush1.bf16.msra.mxu0 %v533
        %757 = vmatprep.subr.bf16.mxu0 0
        %758 = vmatpush1.bf16.msra.mxu0 %v536
        %759 = vmatprep.subr.bf16.mxu0 0
        %760 = vmatpush1.bf16.msra.mxu0 %v539
        %761 = vmatprep.subr.bf16.mxu0 0
        %762 = vmatpush1.bf16.msra.mxu0 %v542
        %763 = vmatprep.subr.bf16.mxu0 0
        %764 = vmatpush1.bf16.msra.mxu0 %v545
        %765 = vmatprep.subr.bf16.mxu0 0
        %766 = vmatpush1.bf16.msra.mxu0 %v548
        %767 = vmatprep.subr.bf16.mxu0 0
        %768 = vmatpush1.bf16.msra.mxu0 %v551
        %769 = vmatprep.subr.bf16.mxu0 0
        %770 = vmatpush1.bf16.msra.mxu0 %v554
        %771 = vmatprep.subr.bf16.mxu0 0
        %772 = vmatpush1.bf16.msra.mxu0 %v557
        %773 = vmatprep.subr.bf16.mxu0 0
        %774 = vmatpush1.bf16.msra.mxu0 %v560
        %775 = vmatprep.subr.bf16.mxu0 0
        %776 = vmatpush1.bf16.msra.mxu0 %v563
        %777 = vmatprep.subr.bf16.mxu0 0
        %778 = vmatpush1.bf16.msra.mxu0 %v566
        %779 = vmatprep.subr.bf16.mxu0 0
        %780 = vmatpush1.bf16.msra.mxu0 %v569
        %781 = vmatprep.subr.bf16.mxu0 0
        %782 = vmatpush1.bf16.msra.mxu0 %v572
        %783 = vmatprep.mubr.bf16.mxu0 %v280
        %784 = vmatmul.mubr.bf16.gmra.mrb[0].mxu0 %v279
        %v785 = vpop.f32.mrb[0].mxu0
        %v786 = vadd.f32 0.0, %v785
        %v787 = vpop.f32.mrb[0].mxu0
        %v788 = vpop.f32.mrb[0].mxu0
        %v789 = vpop.f32.mrb[0].mxu0
        %790 = vdwg.mxu0
        %791 = vmatprep.subr.bf16.mxu0 0
        %792 = vmatpush1.bf16.msra.mxu0 %v575
        %793 = vmatprep.subr.bf16.mxu0 0
        %794 = vmatpush1.bf16.msra.mxu0 %v578
        %795 = vmatprep.subr.bf16.mxu0 0
        %796 = vmatpush1.bf16.msra.mxu0 %v581
        %797 = vmatprep.subr.bf16.mxu0 0
        %798 = vmatpush1.bf16.msra.mxu0 %v584
        %799 = vmatprep.subr.bf16.mxu0 0
        %800 = vmatpush1.bf16.msra.mxu0 %v587
        %801 = vmatprep.subr.bf16.mxu0 0
        %802 = vmatpush1.bf16.msra.mxu0 %v590
        %803 = vmatprep.subr.bf16.mxu0 0
        %804 = vmatpush1.bf16.msra.mxu0 %v593
        %805 = vmatprep.subr.bf16.mxu0 0
        %806 = vmatpush1.bf16.msra.mxu0 %v596
        %807 = vmatprep.subr.bf16.mxu0 0
        %808 = vmatpush1.bf16.msra.mxu0 0
        %809 = vmatprep.subr.bf16.mxu0 0
        %810 = vmatpush1.bf16.msra.mxu0 0
        %811 = vmatprep.subr.bf16.mxu0 0
        %812 = vmatpush1.bf16.msra.mxu0 0
        %813 = vmatprep.subr.bf16.mxu0 0
        %814 = vmatpush1.bf16.msra.mxu0 0
        %815 = vmatprep.subr.bf16.mxu0 0
        %816 = vmatpush1.bf16.msra.mxu0 0
        %817 = vmatprep.subr.bf16.mxu0 0
        %818 = vmatpush1.bf16.msra.mxu0 0
        %819 = vmatprep.subr.bf16.mxu0 0
        %820 = vmatpush1.bf16.msra.mxu0 0
        %821 = vmatprep.subr.bf16.mxu0 0
        %822 = vmatpush1.bf16.msra.mxu0 0
        %823 = vmatprep.mubr.bf16.mxu0 0
        %824 = vmatmul.mubr.bf16.gmra.mrb[0].mxu0 %v281
        %v825 = vpop.f32.mrb[0].mxu0
        %v826 = vadd.f32 %v786, %v825
        %v827 = vpop.f32.mrb[0].mxu0
        %v828 = vpop.f32.mrb[0].mxu0
        %v829 = vpop.f32.mrb[0].mxu0
        %830 = vdwg.mxu0
        %v831 = vpack.c.bf16 %v745, %v745
        %v832 = vmul.f32 %v747, 0.05103104
        %v833 = vpack.c.bf16 %v832, %v832
        %v834 = vpack.c.bf16 %v826, %v826
        %835 = vmatprep.subr.bf16.mxu0 0
        %836 = vmatpush1.bf16.xpose.msra.mxu0 %v831
        %837 = vmatprep.subr.bf16.mxu0 0
        %838 = vmatpush1.bf16.xpose.msra.mxu0 0
        %839 = vmatprep.subr.bf16.mxu0 0
        %840 = vmatpush1.bf16.xpose.msra.mxu0 0
        %841 = vmatprep.subr.bf16.mxu0 0
        %842 = vmatpush1.bf16.xpose.msra.mxu0 0
        %843 = vmatprep.subr.bf16.mxu0 0
        %844 = vmatpush1.bf16.xpose.msra.mxu0 0
        %845 = vmatprep.subr.bf16.mxu0 0
        %846 = vmatpush1.bf16.xpose.msra.mxu0 0
        %847 = vmatprep.subr.bf16.mxu0 0
        %848 = vmatpush1.bf16.xpose.msra.mxu0 0
        %849 = vmatprep.subr.bf16.mxu0 0
        %850 = vmatpush1.bf16.xpose.msra.mxu0 0
        %851 = vmatprep.subr.bf16.mxu0 0
        %852 = vmatpush1.bf16.xpose.msra.mxu0 0
        %853 = vmatprep.subr.bf16.mxu0 0
        %854 = vmatpush1.bf16.xpose.msra.mxu0 0
        %855 = vmatprep.subr.bf16.mxu0 0
        %856 = vmatpush1.bf16.xpose.msra.mxu0 0
        %857 = vmatprep.subr.bf16.mxu0 0
        %858 = vmatpush1.bf16.xpose.msra.mxu0 0
        %859 = vmatprep.subr.bf16.mxu0 0
        %860 = vmatpush1.bf16.xpose.msra.mxu0 0
        %861 = vmatprep.subr.bf16.mxu0 0
        %862 = vmatpush1.bf16.xpose.msra.mxu0 0
        %863 = vmatprep.subr.bf16.mxu0 0
        %864 = vmatpush1.bf16.xpose.msra.mxu0 0
        %865 = vmatprep.subr.bf16.mxu0 0
        %866 = vmatpush1.bf16.xpose.msra.mxu0 0
        %867 = vmatprep.mubr.bf16.mxu0 0
        %868 = vmatmul.mubr.bf16.gmra.mrb[0].mxu0 %v833
        %v869 = vpop.f32.mrb[0].mxu0
        %v870 = vadd.f32 0.0, %v869
        %v871 = vpop.f32.mrb[0].mxu0
        %v872 = vpop.f32.mrb[0].mxu0
        %v873 = vpop.f32.mrb[0].mxu0
        %874 = vdwg.mxu0
        %v875 = vlaneseq
        %v876 = vshrl.u32 %v875, 7
        %v877 = vlaneseq
        %v878 = vand.u32 %v877, 127
        %vm879 = vcmp.le.s32.totalorder %v878, %v876
        %v880 = vsel %vm879, %v870, -inf
        %vm881 = vcmask 64512
        %v882 = vsel %vm881, %v880, -inf
        %883 = vmax.xlane.f32.xlu0 %v882
        %v884 = vpop.xlane.xlu0 %883
        %v885 = vsub.f32 %v880, %v884
        %v886 = vmul.f32 %v885, 1.442695
        %v887 = vpow.pop %v886
        %v888 = vsel %vm881, %v887, 0.0
        %889 = vadd.xlane.f32.xlu0 %v888
        %v890 = vpop.xlane.xlu0 %889
        %v891 = vrcp.pop %v890
        %v892 = vmul.f32 %v887, %v891
        %v893 = vpack.c.bf16 %v892, %v892
        %v895 = vsel %vm881, %v893, 0
        %vm897 = vcmask 1043456
        %v899 = vsel %vm897, %v834, 0
        %901 = vmatprep.subr.bf16.mxu0 0
        %902 = vmatpush1.bf16.msra.mxu0 %v899
        %903 = vmatprep.subr.bf16.mxu0 0
        %904 = vmatpush1.bf16.msra.mxu0 0
        %905 = vmatprep.subr.bf16.mxu0 0
        %906 = vmatpush1.bf16.msra.mxu0 0
        %907 = vmatprep.subr.bf16.mxu0 0
        %908 = vmatpush1.bf16.msra.mxu0 0
        %909 = vmatprep.subr.bf16.mxu0 0
        %910 = vmatpush1.bf16.msra.mxu0 0
        %911 = vmatprep.subr.bf16.mxu0 0
        %912 = vmatpush1.bf16.msra.mxu0 0
        %913 = vmatprep.subr.bf16.mxu0 0
        %914 = vmatpush1.bf16.msra.mxu0 0
        %915 = vmatprep.subr.bf16.mxu0 0
        %916 = vmatpush1.bf16.msra.mxu0 0
        %917 = vmatprep.subr.bf16.mxu0 0
        %918 = vmatpush1.bf16.msra.mxu0 0
        %919 = vmatprep.subr.bf16.mxu0 0
        %920 = vmatpush1.bf16.msra.mxu0 0
        %921 = vmatprep.subr.bf16.mxu0 0
        %922 = vmatpush1.bf16.msra.mxu0 0
        %923 = vmatprep.subr.bf16.mxu0 0
        %924 = vmatpush1.bf16.msra.mxu0 0
        %925 = vmatprep.subr.bf16.mxu0 0
        %926 = vmatpush1.bf16.msra.mxu0 0
        %927 = vmatprep.subr.bf16.mxu0 0
        %928 = vmatpush1.bf16.msra.mxu0 0
        %929 = vmatprep.subr.bf16.mxu0 0
        %930 = vmatpush1.bf16.msra.mxu0 0
        %931 = vmatprep.subr.bf16.mxu0 0
        %932 = vmatpush1.bf16.msra.mxu0 0
        %933 = vmatprep.mubr.bf16.mxu0 0
        %934 = vmatmul.mubr.bf16.gmra.mrb[0].mxu0 %v895
        %v935 = vpop.f32.mrb[0].mxu0
        %v936 = vadd.f32 0.0, %v935
        %v937 = vpop.f32.mrb[0].mxu0
        %v938 = vpop.f32.mrb[0].mxu0
        %v939 = vpop.f32.mrb[0].mxu0
        %940 = vdwg.mxu0
        %vm941 = vcmask 523264
        %942 = vst.msk [vmem:[%s174] sm:$0xff] %vm941, %v936
        %s943 = sand.u32 %s75, 1
        %s944 = scalar_lea.sflag [#allocation4], %s943
        %s945 = sand.u32 %s75, 1
        %s946 = smul.addr %s945, 8
        %s947 = scalar_lea.vmem [#allocation7], %s946
        // Predicated region
        $region37: #{tpu_custom_call.1} parent=27 // pred_check
          %p948 = pneg %p85
        $region38: #{tpu_custom_call.1} parent=27 // pred_check_branch
          %950 = sbr.rel (%p948) target = $region40
        $region39: #{tpu_custom_call.1} parent=27 // pred_region
          %s952 = ssub.s32 128, 128
          %953 = vsyncadd %s944, %s952
          %s954 = smul.addr %s20, 128
          %s955 = scalar_lea.hbm %s2, %s954
          %s957 = sshll.u32 %s947, 4
          %s958 = int_to_ptr.vmem [resolvable:$true] %s957
          %960 = dma.vmem_to_hbm [thread:$0]  %s958, 128, %s955, %s944
        $region40: #{tpu_custom_call.1} parent=27 // pred_fallthru
          _
      $region28: #{tpu_custom_call.1} parent=5 // pred_fallthru
        _
      %p961 = scmp.le.s32.totalorder 2, %s15
      // Predicated region
      $region41: #{tpu_custom_call.1} parent=5 // pred_check
        %p962 = pneg %p961
      $region42: #{tpu_custom_call.1} parent=5 // pred_check_branch
        %964 = sbr.rel (%p962) target = $region44
      $region43: #{tpu_custom_call.1} parent=5 // pred_region
        %s965 = ssub.s32 %s15, 2
        // Predicated region
        $region45: #{tpu_custom_call.1} parent=43 // pred_check
          %p966 = pneg %p91
        $region46: #{tpu_custom_call.1} parent=43 // pred_check_branch
          %968 = sbr.rel (%p966) target = $region48
        $region47: #{tpu_custom_call.1} parent=43 // pred_region
          %s969 = sand.u32 %s76, 1
          %s970 = scalar_lea.sflag [#allocation4], %s969
          %s971 = sand.u32 %s76, 1
          %s972 = smul.addr %s971, 8
          %s973 = scalar_lea.vmem [#allocation7], %s972
          %974 = dma.done %s970, 128
        $region48: #{tpu_custom_call.1} parent=43 // pred_fallthru
          _
      $region44: #{tpu_custom_call.1} parent=5 // pred_fallthru
        _
    $region6: #{tpu_custom_call.1} parent=1 // loop_footer
      %s19 = sadd.s32 1, %s15
    $region7: #{tpu_custom_call.1} parent=1 // loop_footer_branch
      %14 = sbr.rel target = $region3
    $region8: #{tpu_custom_call.1} parent=1 // loop_exit
      _
    %975 = vsyncpa [#allocation3], 1
    %s976 = scalar_lea.sflag [#allocation3], 1
    %977 = vsyncpa %s976, 1
    %978 = vsyncpa [#allocation6], 1
    %979 = vsyncpa [#allocation4], 1
    %s980 = scalar_lea.sflag [#allocation4], 1
    %981 = vsyncpa %s980, 1

</llo_original>
